<compile_context>
chip_gen: v7x
topology: tpu7x:2x2x1
jax: 0.10.0
libtpu: 0.0.40
codegen_flags: <defaults>
</compile_context>

<pallas_src>
import jax
import jax.numpy as jnp
from jax.experimental import pallas as pl
from jax.experimental.pallas import tpu as pltpu


def _s2dconv_kernel(x_ref, w_ref, scale_ref, bias_ref, o_ref):
    # x_ref:     (K, TP)   feature-major space-to-depth pixels (input dtype)
    # w_ref:     (OC, K)   1x1 conv weight, torch channel order (input dtype)
    # scale_ref: (OC, 1)   BN scale  gamma / sqrt(var + eps)   (f32)
    # bias_ref:  (OC, 1)   BN bias   beta - mean * scale       (f32)
    # o_ref:     (OC, TP)  lane-dense output tile
    y = jnp.dot(w_ref[...], x_ref[...], preferred_element_type=jnp.float32)  # MXU, (OC, TP)
    y = y * scale_ref[...] + bias_ref[...]        # BN epilogue in f32, lane-dense layout
    y = y * (1.0 / (1.0 + jnp.exp(-y)))           # exact SiLU (exp on EUP; op is HBM-bound)
    o_ref[...] = y.astype(o_ref.dtype)


def _choose_tile_p(P, K, OC, dtype_bytes, desired=16384, vmem_budget=32 * 1024 * 1024):
    """Pixel tile: divides P exactly (no pad/slice), multiple of 128 when possible,
    sized so the double-buffered (x block + out block) stays under `vmem_budget`
    (which is v7x-safe; v5e/v6e have more VMEM but don't need bigger tiles)."""
    per_col = 2 * (K + OC) * dtype_bytes + 4 * OC      # dbl-buffered blocks + f32 epilogue
    desired = max(128, min(desired, vmem_budget // max(per_col, 1)))
    if P <= desired:
        return P                      # single full-dim tile per batch element
    if P % 128 == 0:
        best = 128                    # 128 always divides P here
        t = 256
        while t <= desired:           # largest multiple of 128 that divides P
            if P % t == 0:
                best = t
            t += 128
        return best
    # Ragged P: one full-dim tile per batch element keeps everything exact.
    # TODO(synk): masked ragged tail for very large, non-128-multiple Ho*Wo.
    return P


def s2dconv_forward(x_nchw, conv_weight, bn_gamma, bn_beta, bn_mean, bn_var,
                    eps=1e-5, tile_p=16384):
    """S2DConv forward. x_nchw: (N, C, H, W); conv_weight: (OC, 4C, 1, 1)."""
    N, C, H, W = x_nchw.shape
    assert H % 2 == 0 and W % 2 == 0, (H, W)
    OC = conv_weight.shape[0]
    Ho, Wo = H // 2, W // 2
    P = Ho * Wo
    K = 4 * C

    # --- space-to-depth, directly in the feature-major layout the kernel consumes ---
    # (N,C,H,W) -> (N,C,Ho,2,Wo,2)  [metadata only] -> (N, dw, dh, C, Ho, Wo) -> (N, 4C, Ho*Wo)
    # Channel index (dw*2+dh)*C + c reproduces torch.cat block order
    # [(0,0),(1,0),(0,1),(1,1)], so the conv weight is used unpermuted.
    # TODO(synk): fuse this single rearrange pass into the kernel input path.
    x6 = x_nchw.reshape(N, C, Ho, 2, Wo, 2)
    x_sd = jnp.transpose(x6, (0, 5, 3, 1, 2, 4)).reshape(N, K, P)

    # Weight stays unscaled in the activation dtype; BN scale/bias stay f32 (epilogue).
    w = conv_weight.reshape(OC, K).astype(x_nchw.dtype)
    scale = bn_gamma.astype(jnp.float32) / jnp.sqrt(bn_var.astype(jnp.float32) + eps)
    bias = bn_beta.astype(jnp.float32) - bn_mean.astype(jnp.float32) * scale
    scale2 = scale.reshape(OC, 1)
    bias2 = bias.reshape(OC, 1)

    dtype_bytes = jnp.dtype(x_nchw.dtype).itemsize
    tp = _choose_tile_p(P, K, OC, dtype_bytes, desired=tile_p)
    grid = (N, P // tp)

    # TODO(synk): for large OC (or K), add a "parallel" OC grid axis with a
    # 128-multiple tile (and a K axis + f32 accumulator) to bound per-step VMEM.
    out = pl.pallas_call(
        _s2dconv_kernel,
        out_shape=jax.ShapeDtypeStruct((N, OC, P), x_nchw.dtype),
        grid_spec=pltpu.PrefetchScalarGridSpec(
            num_scalar_prefetch=0,
            grid=grid,
            in_specs=[
                pl.BlockSpec((None, K, tp), lambda n, i: (n, 0, i)),   # x: feature-major
                pl.BlockSpec((OC, K), lambda n, i: (0, 0)),            # weight (resident)
                pl.BlockSpec((OC, 1), lambda n, i: (0, 0)),            # BN scale (f32)
                pl.BlockSpec((OC, 1), lambda n, i: (0, 0)),            # BN bias  (f32)
            ],
            out_specs=pl.BlockSpec((None, OC, tp), lambda n, i: (n, 0, i)),
        ),
        compiler_params=pltpu.CompilerParams(
            dimension_semantics=("parallel", "parallel"),
            # Blocks are budgeted to <= ~32 MiB, so 48 MiB is safe on every
            # generation (under v7x's 64 MiB physical VMEM, above v5e's default).
            vmem_limit_bytes=48 * 1024 * 1024),
    )(x_sd, w, scale2, bias2)

    # (N, OC, Ho*Wo) -> (N, OC, Ho, Wo): metadata-only, no HBM copy.
    return out.reshape(N, OC, Ho, Wo)


def _reference(x, conv_weight, bn_gamma, bn_beta, bn_mean, bn_var, eps=1e-5):
    OC = conv_weight.shape[0]
    x_sd = jnp.concatenate([x[..., ::2, ::2], x[..., 1::2, ::2],
                            x[..., ::2, 1::2], x[..., 1::2, 1::2]], axis=1)
    y = jnp.einsum("nchw,oc->nohw", x_sd, conv_weight.reshape(OC, -1),
                   precision=jax.lax.Precision.HIGHEST)
    scale = bn_gamma / jnp.sqrt(bn_var + eps)
    bias = bn_beta - bn_mean * scale
    y = y * scale[None, :, None, None] + bias[None, :, None, None]
    return y * jax.nn.sigmoid(y)


if __name__ == "__main__":
    base_key = jax.random.PRNGKey(0)

    def make_inputs(case, N, C, H, W, OC):
        ks = jax.random.split(jax.random.fold_in(base_key, case), 6)
        x = jax.random.normal(ks[0], (N, C, H, W), dtype=jnp.float32)
        w = jax.random.normal(ks[1], (OC, 4 * C, 1, 1), dtype=jnp.float32) * 0.1
        g = 1.0 + 0.1 * jax.random.normal(ks[2], (OC,), dtype=jnp.float32)
        b = 0.1 * jax.random.normal(ks[3], (OC,), dtype=jnp.float32)
        m = 0.05 * jax.random.normal(ks[4], (OC,), dtype=jnp.float32)
        v = 1.0 + 0.1 * jax.random.uniform(ks[5], (OC,), dtype=jnp.float32)
        return x, w, g, b, m, v

    # Case 1: nominal small shape (N=2, C=4, H=W=16, OC=8); single pixel tile / image.
    args1 = make_inputs(0, 2, 4, 16, 16, 8)
    out1 = jax.block_until_ready(s2dconv_forward(*args1))
    ref1 = _reference(*args1)
    assert out1.shape == (2, 8, 8, 8), out1.shape
    err1 = float(jnp.max(jnp.abs(out1 - ref1)))
    assert jnp.allclose(out1, ref1, atol=5e-3, rtol=5e-3), err1

    # Case 2: exercises the multi-tile grid path (tile_p=128 -> grid (1, 2)) and K=12.
    args2 = make_inputs(1, 1, 3, 32, 32, 16)
    out2 = jax.block_until_ready(s2dconv_forward(*args2, tile_p=128))
    ref2 = _reference(*args2)
    assert out2.shape == (1, 16, 16, 16), out2.shape
    err2 = float(jnp.max(jnp.abs(out2 - ref2)))
    assert jnp.allclose(out2, ref2, atol=5e-3, rtol=5e-3), err2

    print("KERNEL_OK")
</pallas_src>

<mosaic_0001>
module attributes {stable_mosaic.version = 11 : i64} {
  func.func @_s2dconv_kernel(%arg0: i32, %arg1: i32, %arg2: memref<1x16x64xf32, #tpu.memory_space<vmem>>, %arg3: memref<8x16xf32, #tpu.memory_space<vmem>>, %arg4: memref<8x1xf32, #tpu.memory_space<vmem>>, %arg5: memref<8x1xf32, #tpu.memory_space<vmem>>, %arg6: memref<1x8x64xf32, #tpu.memory_space<vmem>>) attributes {dimension_semantics = [#tpu.dimension_semantics<parallel>, #tpu.dimension_semantics<parallel>], iteration_bounds = array<i64: 2, 1>, scalar_prefetch = 0 : i64, scratch_operands = 0 : i64, tpu.core_type = #tpu.core_type<tc>, window_params = [{transform_indices = @transform_0, window_bounds = array<i64: 1, 16, 64>}, {pipeline_mode = #tpu.pipeline_mode<synchronous>, transform_indices = @transform_1, window_bounds = array<i64: 8, 16>}, {pipeline_mode = #tpu.pipeline_mode<synchronous>, transform_indices = @transform_2, window_bounds = array<i64: 8, 1>}, {pipeline_mode = #tpu.pipeline_mode<synchronous>, transform_indices = @transform_3, window_bounds = array<i64: 8, 1>}, {transform_indices = @transform_4, window_bounds = array<i64: 1, 8, 64>}]} {
    %c0 = arith.constant 0 : index
    %c0_0 = arith.constant 0 : index
    %0 = vector.load %arg3[%c0, %c0_0] : memref<8x16xf32, #tpu.memory_space<vmem>>, vector<8x16xf32>
    %c0_1 = arith.constant 0 : index
    %c0_2 = arith.constant 0 : index
    %c0_3 = arith.constant 0 : index
    %1 = vector.load %arg2[%c0_1, %c0_2, %c0_3] : memref<1x16x64xf32, #tpu.memory_space<vmem>>, vector<1x16x64xf32>
    %2 = vector.shape_cast %1 : vector<1x16x64xf32> to vector<16x64xf32>
    %cst = arith.constant dense<0.000000e+00> : vector<8x64xf32>
    %3 = tpu.matmul %0, %2, %cst {dimension_numbers = #tpu.dot_dimension_numbers<[1], [0], [0], [1], [0, 0, 1, 1], [], []>} : vector<8x16xf32>, vector<16x64xf32>, vector<8x64xf32> -> vector<8x64xf32>
    %c0_4 = arith.constant 0 : index
    %c0_5 = arith.constant 0 : index
    %4 = vector.load %arg4[%c0_4, %c0_5] : memref<8x1xf32, #tpu.memory_space<vmem>>, vector<8x1xf32>
    %5 = vector.broadcast %4 : vector<8x1xf32> to vector<8x64xf32>
    %6 = arith.mulf %3, %5 : vector<8x64xf32>
    %c0_6 = arith.constant 0 : index
    %c0_7 = arith.constant 0 : index
    %7 = vector.load %arg5[%c0_6, %c0_7] : memref<8x1xf32, #tpu.memory_space<vmem>>, vector<8x1xf32>
    %8 = vector.broadcast %7 : vector<8x1xf32> to vector<8x64xf32>
    %9 = arith.addf %6, %8 : vector<8x64xf32>
    %cst_8 = arith.constant 0.000000e+00 : f32
    %10 = vector.broadcast %cst_8 : f32 to vector<8x64xf32>
    %11 = arith.subf %10, %9 : vector<8x64xf32>
    %12 = math.exp %11 : vector<8x64xf32>
    %cst_9 = arith.constant 1.000000e+00 : f32
    %13 = vector.broadcast %cst_9 : f32 to vector<8x64xf32>
    %14 = arith.addf %13, %12 : vector<8x64xf32>
    %cst_10 = arith.constant 1.000000e+00 : f32
    %15 = vector.broadcast %cst_10 : f32 to vector<8x64xf32>
    %16 = arith.divf %15, %14 : vector<8x64xf32>
    %17 = arith.mulf %9, %16 : vector<8x64xf32>
    %c0_11 = arith.constant 0 : index
    %c0_12 = arith.constant 0 : index
    %c0_13 = arith.constant 0 : index
    %18 = vector.load %arg6[%c0_11, %c0_12, %c0_13] : memref<1x8x64xf32, #tpu.memory_space<vmem>>, vector<1x8x64xf32>
    %19 = vector.shape_cast %18 : vector<1x8x64xf32> to vector<8x64xf32>
    %20 = vector.shape_cast %17 : vector<8x64xf32> to vector<1x8x64xf32>
    tpu.vector_store %arg6[%c0_11, %c0_12, %c0_13], %20 {strides = array<i32>} : memref<1x8x64xf32, #tpu.memory_space<vmem>>, vector<1x8x64xf32>,
    return
  }
  func.func @transform_0(%arg0: i32, %arg1: i32) -> (i32, i32, i32) {
    %c0_i32 = arith.constant 0 : i32
    %c0_i32_0 = arith.constant 0 : i32
    return %arg0, %c0_i32, %arg1 : i32, i32, i32
  }
  func.func @transform_1(%arg0: i32, %arg1: i32) -> (i32, i32) {
    %c0_i32 = arith.constant 0 : i32
    %c0_i32_0 = arith.constant 0 : i32
    %c0_i32_1 = arith.constant 0 : i32
    return %c0_i32, %c0_i32_0 : i32, i32
  }
  func.func @transform_2(%arg0: i32, %arg1: i32) -> (i32, i32) {
    %c0_i32 = arith.constant 0 : i32
    %c0_i32_0 = arith.constant 0 : i32
    %c0_i32_1 = arith.constant 0 : i32
    return %c0_i32, %c0_i32_0 : i32, i32
  }
  func.func @transform_3(%arg0: i32, %arg1: i32) -> (i32, i32) {
    %c0_i32 = arith.constant 0 : i32
    %c0_i32_0 = arith.constant 0 : i32
    %c0_i32_1 = arith.constant 0 : i32
    return %c0_i32, %c0_i32_0 : i32, i32
  }
  func.func @transform_4(%arg0: i32, %arg1: i32) -> (i32, i32, i32) {
    %c0_i32 = arith.constant 0 : i32
    %c0_i32_0 = arith.constant 0 : i32
    return %arg0, %c0_i32, %arg1 : i32, i32, i32
  }
}

</mosaic_0001>

<llo_original>
// kernel: tpu_custom_call.1
$region0: #{tpu_custom_call.1}
  #allocation0 [shape = 'u32[]', space=smem, size = 0x4, offset = 0x4, fixed_abs, tag = 'smem constant byte address 0x4 - core index']
  #allocation1 [shape = 'u32[144,128]{1,0:T(1,128)}', space=vmem, size = 0x12000, scoped, tag = 'internal scratch']
  %s0 = inlined_call_operand.hbm [shape: f32[2,16,64], index: 0, kind: input, shape index: {}]
  %s1 = inlined_call_operand.vmem [shape: f32[8,16], index: 1, kind: input, shape index: {}]
  %s2 = inlined_call_operand.vmem [shape: f32[8,1], index: 2, kind: input, shape index: {}]
  %s3 = inlined_call_operand.vmem [shape: f32[8,1], index: 3, kind: input, shape index: {}]
  %s4 = inlined_call_operand.hbm [shape: f32[2,8,64], index: 4, kind: output, shape index: {}]
  %s5 = sld [smem:[#allocation0]]
  $region53: #{tpu_custom_call.1} parent=0
    _
  %s7 = ssub.s32 1, %s5
  %s8 = scalar_select 0, %s7, %s5
  $region1: #{tpu_custom_call.1} parent=0
    #allocation2 [shape = 'u8[16384]{0}', space=vmem, size = 0x4000, scoped, tag = 'input window, operand 0']
    #allocation3 [shape = 's32[2]{0}', space=sflag, size = 0x8, scoped, tag = 'scoped memory for tpu_custom_call.1']
    #allocation4 [shape = 's32[2]{0}', space=sflag, size = 0x8, scoped, tag = 'scoped memory for tpu_custom_call.1']
    #allocation5 [shape = 'u8[8192]{0}', space=vmem, size = 0x2000, scoped, tag = 'output window, operand 0']
    %9 = vsyncpa [#allocation3], 0
    %s10 = scalar_lea.sflag [#allocation3], 1
    %11 = vsyncpa %s10, 0
    %12 = vsyncpa [#allocation4], 0
    %s13 = scalar_lea.sflag [#allocation4], 1
    %14 = vsyncpa %s13, 0
    loop: start=0, step=1, limit=4
    $region2: #{tpu_custom_call.1} parent=1 // loop_pre_header
      _
    $region3: #{tpu_custom_call.1} parent=1 // loop_header
      %s16 = sphi 0, %s20
      %p17 = scmp.ge.s32.totalorder %s16, 4
      %s23 = sphi 0, %s35
      %s24 = sphi 0, %s31
      %s25 = sphi 0, %s23
      %s26 = sphi 0, %s24
      %s27 = sphi 0, %s25
      %s28 = sphi 0, %s26
      %s40 = sphi 0, %s42
      %s43 = sphi 0, %s40
      %s44 = sphi 0, %s43
      %s60 = sphi 0, %s44
      %s64 = sphi 0, %s64
      %s66 = sphi 0, %s64
      %s67 = sphi 0, %s66
      %s81 = sphi 0, %s67
      %s85 = sphi 0, %s85
      %s87 = sphi 0, %s85
      %s88 = sphi 0, %s87
      %s102 = sphi 0, %s88
      %s106 = sphi 0, %s106
      %s108 = sphi 0, %s106
      %s109 = sphi 0, %s108
      %s123 = sphi 0, %s109
      %s131 = sphi 0, %s133
      %s134 = sphi 0, %s131
      %s135 = sphi 0, %s134
      %s151 = sphi 0, %s135
    $region4: #{tpu_custom_call.1} parent=1 // loop_header_branch
      %19 = sbr.rel (%p17) target = $region8
    $region5: #{tpu_custom_call.1} parent=1 // loop_body
      %s21 = ssub.s32 %s16, 1
      %s22 = ssub.s32 %s16, 2
      %s29 = sadd.s32 1, %s24
      %p30 = scmp.ge.s32.totalorder %s29, 1
      %s31 = scalar_select %p30, 0, %s29
      %s32 = sadd.s32 1, %s23
      %s33 = scalar_select %p30, %s32, %s23
      %p34 = scmp.ge.s32.totalorder %s33, 2
      %s35 = scalar_select %p34, 0, %s33
      %s36 = ssub.s32 %s23, %s35
      %s37 = ssub.s32 %s24, %s31
      %s38 = sor.u32 %s36, %s37
      %p39 = scmp.eq.s32.totalorder %s38, 0
      %s41 = sadd.s32 %s40, 1
      %s42 = scalar_select %p39, %s40, %s41
      %p45 = pneg %p39
      %p46 = scmp.eq.s32.totalorder %s16, 1
      %p47 = por %p45, %p46
      %p48 = scmp.ne.s32.totalorder %s40, %s43
      %p49 = scmp.eq.s32.totalorder %s16, 0
      %p50 = por %p48, %p49
      %p51 = scmp.ne.s32.totalorder %s40, %s43
      %p52 = scmp.eq.s32.totalorder %s21, 1
      %p53 = por %p51, %p52
      %p54 = scmp.ne.s32.totalorder %s43, %s44
      %p55 = scmp.eq.s32.totalorder %s21, 0
      %p56 = por %p54, %p55
      %p57 = scmp.ne.s32.totalorder %s43, %s44
      %p58 = scmp.eq.s32.totalorder %s22, 1
      %p59 = por %p57, %p58
      %p61 = scmp.ne.s32.totalorder %s44, %s60
      %p62 = scmp.eq.s32.totalorder %s22, 0
      %p63 = por %p61, %p62
      %s65 = sadd.s32 %s64, 1
      %p68 = scmp.eq.s32.totalorder %s16, 1
      %p69 = scmp.ne.s32.totalorder %s64, %s66
      %p70 = scmp.eq.s32.totalorder %s16, 0
      %p71 = por %p69, %p70
      %p72 = scmp.ne.s32.totalorder %s64, %s66
      %p73 = scmp.eq.s32.totalorder %s21, 1
      %p74 = por %p72, %p73
      %p75 = scmp.ne.s32.totalorder %s66, %s67
      %p76 = scmp.eq.s32.totalorder %s21, 0
      %p77 = por %p75, %p76
      %p78 = scmp.ne.s32.totalorder %s66, %s67
      %p79 = scmp.eq.s32.totalorder %s22, 1
      %p80 = por %p78, %p79
      %p82 = scmp.ne.s32.totalorder %s67, %s81
      %p83 = scmp.eq.s32.totalorder %s22, 0
      %p84 = por %p82, %p83
      %s86 = sadd.s32 %s85, 1
      %p89 = scmp.eq.s32.totalorder %s16, 1
      %p90 = scmp.ne.s32.totalorder %s85, %s87
      %p91 = scmp.eq.s32.totalorder %s16, 0
      %p92 = por %p90, %p91
      %p93 = scmp.ne.s32.totalorder %s85, %s87
      %p94 = scmp.eq.s32.totalorder %s21, 1
      %p95 = por %p93, %p94
      %p96 = scmp.ne.s32.totalorder %s87, %s88
      %p97 = scmp.eq.s32.totalorder %s21, 0
      %p98 = por %p96, %p97
      %p99 = scmp.ne.s32.totalorder %s87, %s88
      %p100 = scmp.eq.s32.totalorder %s22, 1
      %p101 = por %p99, %p100
      %p103 = scmp.ne.s32.totalorder %s88, %s102
      %p104 = scmp.eq.s32.totalorder %s22, 0
      %p105 = por %p103, %p104
      %s107 = sadd.s32 %s106, 1
      %p110 = scmp.eq.s32.totalorder %s16, 1
      %p111 = scmp.ne.s32.totalorder %s106, %s108
      %p112 = scmp.eq.s32.totalorder %s16, 0
      %p113 = por %p111, %p112
      %p114 = scmp.ne.s32.totalorder %s106, %s108
      %p115 = scmp.eq.s32.totalorder %s21, 1
      %p116 = por %p114, %p115
      %p117 = scmp.ne.s32.totalorder %s108, %s109
      %p118 = scmp.eq.s32.totalorder %s21, 0
      %p119 = por %p117, %p118
      %p120 = scmp.ne.s32.totalorder %s108, %s109
      %p121 = scmp.eq.s32.totalorder %s22, 1
      %p122 = por %p120, %p121
      %p124 = scmp.ne.s32.totalorder %s109, %s123
      %p125 = scmp.eq.s32.totalorder %s22, 0
      %p126 = por %p124, %p125
      %s127 = ssub.s32 %s23, %s35
      %s128 = ssub.s32 %s24, %s31
      %s129 = sor.u32 %s127, %s128
      %p130 = scmp.eq.s32.totalorder %s129, 0
      %s132 = sadd.s32 %s131, 1
      %s133 = scalar_select %p130, %s131, %s132
      %p136 = pneg %p130
      %p137 = scmp.eq.s32.totalorder %s16, 1
      %p138 = por %p136, %p137
      %p139 = scmp.ne.s32.totalorder %s131, %s134
      %p140 = scmp.eq.s32.totalorder %s16, 0
      %p141 = por %p139, %p140
      %p142 = scmp.ne.s32.totalorder %s131, %s134
      %p143 = scmp.eq.s32.totalorder %s21, 1
      %p144 = por %p142, %p143
      %p145 = scmp.ne.s32.totalorder %s134, %s135
      %p146 = scmp.eq.s32.totalorder %s21, 0
      %p147 = por %p145, %p146
      %p148 = scmp.ne.s32.totalorder %s134, %s135
      %p149 = scmp.eq.s32.totalorder %s22, 1
      %p150 = por %p148, %p149
      %p152 = scmp.ne.s32.totalorder %s135, %s151
      %p153 = scmp.eq.s32.totalorder %s22, 0
      %p154 = por %p152, %p153
      %p155 = scmp.le.s32.totalorder 1, %s16
      %p156 = scmp.lt.s32.totalorder %s16, 3
      %p157 = pnand %p155, %p156
      %p158 = pneg %p157
      // Predicated region
      $region9: #{tpu_custom_call.1} parent=5 // pred_check
        _
      $region10: #{tpu_custom_call.1} parent=5 // pred_check_branch
        %160 = sbr.rel (%p157) target = $region12
      $region11: #{tpu_custom_call.1} parent=5 // pred_region
        %s161 = ssub.s32 %s16, 1
        // Predicated region
        $region13: #{tpu_custom_call.1} parent=11 // pred_check
          %p162 = pneg %p77
        $region14: #{tpu_custom_call.1} parent=11 // pred_check_branch
          %164 = sbr.rel (%p162) target = $region16
        $region15: #{tpu_custom_call.1} parent=11 // pred_region
          _
        $region16: #{tpu_custom_call.1} parent=11 // pred_fallthru
          _
        // Predicated region
        $region17: #{tpu_custom_call.1} parent=11 // pred_check
          %p165 = pneg %p98
        $region18: #{tpu_custom_call.1} parent=11 // pred_check_branch
          %167 = sbr.rel (%p165) target = $region20
        $region19: #{tpu_custom_call.1} parent=11 // pred_region
          _
        $region20: #{tpu_custom_call.1} parent=11 // pred_fallthru
          _
        // Predicated region
        $region21: #{tpu_custom_call.1} parent=11 // pred_check
          %p168 = pneg %p119
        $region22: #{tpu_custom_call.1} parent=11 // pred_check_branch
          %170 = sbr.rel (%p168) target = $region24
        $region23: #{tpu_custom_call.1} parent=11 // pred_region
          _
        $region24: #{tpu_custom_call.1} parent=11 // pred_fallthru
          _
      $region12: #{tpu_custom_call.1} parent=5 // pred_fallthru
        _
      %p171 = scmp.lt.s32.totalorder %s16, 2
      // Predicated region
      $region25: #{tpu_custom_call.1} parent=5 // pred_check
        %p172 = pneg %p171
      $region26: #{tpu_custom_call.1} parent=5 // pred_check_branch
        %174 = sbr.rel (%p172) target = $region28
      $region27: #{tpu_custom_call.1} parent=5 // pred_region
        // Predicated region
        $region29: #{tpu_custom_call.1} parent=27 // pred_check
          %p175 = pneg %p50
        $region30: #{tpu_custom_call.1} parent=27 // pred_check_branch
          %177 = sbr.rel (%p175) target = $region32
        $region31: #{tpu_custom_call.1} parent=27 // pred_region
          %s178 = sand.u32 %s40, 1
          %s179 = scalar_lea.sflag [#allocation3], %s178
          %s180 = sand.u32 %s40, 1
          %s181 = smul.addr %s180, 16
          %s182 = scalar_lea.vmem [#allocation2], %s181
          %s184 = ssub.s32 256, 256
          %185 = vsyncadd %s179, %s184
          %s186 = smul.addr %s23, 2
          %s187 = sadd.s32 %s24, %s186
          %s188 = smul.addr %s187, 128
          %s189 = scalar_lea.hbm %s0, %s188
          %s190 = sshll.u32 %s182, 4
          %s191 = int_to_ptr.vmem [resolvable:$true] %s190
          %196 = dma.hbm_to_vmem [thread:$0]  %s189, 256, %s191, %s179, 128, 128, 8
        $region32: #{tpu_custom_call.1} parent=27 // pred_fallthru
          _
      $region28: #{tpu_custom_call.1} parent=5 // pred_fallthru
        _
      %p197 = scmp.le.s32.totalorder 1, %s16
      %p198 = scmp.lt.s32.totalorder %s16, 3
      %p199 = pnand %p197, %p198
      %p200 = pneg %p199
      // Predicated region
      $region33: #{tpu_custom_call.1} parent=5 // pred_check
        _
      $region34: #{tpu_custom_call.1} parent=5 // pred_check_branch
        %202 = sbr.rel (%p199) target = $region36
      $region35: #{tpu_custom_call.1} parent=5 // pred_region
        %s203 = ssub.s32 %s16, 1
        %s204 = sand.u32 %s43, 1
        %s205 = scalar_lea.sflag [#allocation3], %s204
        %s206 = sand.u32 %s43, 1
        %s207 = smul.addr %s206, 16
        %s208 = scalar_lea.vmem [#allocation2], %s207
        // Predicated region
        $region37: #{tpu_custom_call.1} parent=35 // pred_check
          %p209 = pneg %p56
        $region38: #{tpu_custom_call.1} parent=35 // pred_check_branch
          %211 = sbr.rel (%p209) target = $region40
        $region39: #{tpu_custom_call.1} parent=35 // pred_region
          %212 = dma.done %s205, 256
        $region40: #{tpu_custom_call.1} parent=35 // pred_fallthru
          _
        %s213 = sand.u32 %s43, 1
        %s214 = scalar_lea.sflag [#allocation3], %s213
        %s215 = sand.u32 %s43, 1
        %s216 = smul.addr %s215, 16
        %s217 = scalar_lea.vmem [#allocation2], %s216
        %p218 = pneg %p56
        %p219 = pneg %p53
        %p220 = pneg %p77
        %p221 = pneg %p74
        %p222 = pneg %p98
        %p223 = pneg %p95
        %p224 = pneg %p119
        %p225 = pneg %p116
        %p226 = pneg %p147
        %p227 = pneg %p144
        %s228 = sand.u32 %s134, 1
        %s229 = scalar_lea.sflag [#allocation4], %s228
        %s230 = sand.u32 %s134, 1
        %s231 = smul.addr %s230, 8
        %s232 = scalar_lea.vmem [#allocation5], %s231
        %v233 = vld [vmem:[%s1] sm:$0xff]
        %v234 = vld [vmem:[%s208] sm:$0xff]
        %v235 = vld [vmem:[%s208 + $0x8] sm:$0xff]
        %vm236 = vcmask 130048
        %v238 = vsel %vm236, %v233, 0
        %240 = vmatprep.subr.mxu0 0.0
        %241 = vmatpush1.msra.mxu0 %v234
        %242 = vmatprep.subr.mxu0 0.0
        %243 = vmatpush1.msra.mxu0 %v235
        %244 = vmatprep.subr.mxu0 0.0
        %245 = vmatpush1.msra.mxu0 0.0
        %246 = vmatprep.subr.mxu0 0.0
        %247 = vmatpush1.msra.mxu0 0.0
        %248 = vmatprep.subr.mxu0 0.0
        %249 = vmatpush1.msra.mxu0 0.0
        %250 = vmatprep.subr.mxu0 0.0
        %251 = vmatpush1.msra.mxu0 0.0
        %252 = vmatprep.subr.mxu0 0.0
        %253 = vmatpush1.msra.mxu0 0.0
        %254 = vmatprep.subr.mxu0 0.0
        %255 = vmatpush1.msra.mxu0 0.0
        %256 = vmatprep.subr.mxu0 0.0
        %257 = vmatpush1.msra.mxu0 0.0
        %258 = vmatprep.subr.mxu0 0.0
        %259 = vmatpush1.msra.mxu0 0.0
        %260 = vmatprep.subr.mxu0 0.0
        %261 = vmatpush1.msra.mxu0 0.0
        %262 = vmatprep.subr.mxu0 0.0
        %263 = vmatpush1.msra.mxu0 0.0
        %264 = vmatprep.subr.mxu0 0.0
        %265 = vmatpush1.msra.mxu0 0.0
        %266 = vmatprep.subr.mxu0 0.0
        %267 = vmatpush1.msra.mxu0 0.0
        %268 = vmatprep.subr.mxu0 0.0
        %269 = vmatpush1.msra.mxu0 0.0
        %270 = vmatprep.subr.mxu0 0.0
        %271 = vmatpush1.msra.mxu0 0.0
        %272 = vmatprep.subr.mxu0 0.0
        %273 = vmatpush1.msra.mxu0 0.0
        %274 = vmatprep.subr.mxu0 0.0
        %275 = vmatpush1.msra.mxu0 0.0
        %276 = vmatprep.subr.mxu0 0.0
        %277 = vmatpush1.msra.mxu0 0.0
        %278 = vmatprep.subr.mxu0 0.0
        %279 = vmatpush1.msra.mxu0 0.0
        %280 = vmatprep.subr.mxu0 0.0
        %281 = vmatpush1.msra.mxu0 0.0
        %282 = vmatprep.subr.mxu0 0.0
        %283 = vmatpush1.msra.mxu0 0.0
        %284 = vmatprep.subr.mxu0 0.0
        %285 = vmatpush1.msra.mxu0 0.0
        %286 = vmatprep.subr.mxu0 0.0
        %287 = vmatpush1.msra.mxu0 0.0
        %288 = vmatprep.subr.mxu0 0.0
        %289 = vmatpush1.msra.mxu0 0.0
        %290 = vmatprep.subr.mxu0 0.0
        %291 = vmatpush1.msra.mxu0 0.0
        %292 = vmatprep.subr.mxu0 0.0
        %293 = vmatpush1.msra.mxu0 0.0
        %294 = vmatprep.subr.mxu0 0.0
        %295 = vmatpush1.msra.mxu0 0.0
        %296 = vmatprep.subr.mxu0 0.0
        %297 = vmatpush1.msra.mxu0 0.0
        %298 = vmatprep.subr.mxu0 0.0
        %299 = vmatpush1.msra.mxu0 0.0
        %300 = vmatprep.subr.mxu0 0.0
        %301 = vmatpush1.msra.mxu0 0.0
        %302 = vmatprep.subr.mxu0 0.0
        %303 = vmatpush1.msra.mxu0 0.0
        %304 = vmatprep.mubr.f32.mxu0 0.0
        %305 = vmatmul.mubr.f32.gmra.mrb[0].mxu0 %v238
        %v306 = vpop.f32.mrb[0].mxu0
        %v307 = vadd.f32 0.0, %v306
        %v308 = vpop.f32.mrb[0].mxu0
        %309 = vdwg.mxu0
        %v310 = vld [vmem:[%s2] sm:$0xff]
        %312 = vset.pattern.permute.xlu0 0
        %313 = vperm.xlu0 %312, %v310
        %v314 = vpop.permute.xlu0 %313
        %v316 = vmul.f32 %v307, %v314
        %v317 = vld [vmem:[%s3] sm:$0xff]
        %319 = vset.pattern.permute.xlu0 0
        %320 = vperm.xlu0 %319, %v317
        %v321 = vpop.permute.xlu0 %320
        %v323 = vadd.f32 %v316, %v321
        %v324 = vsub.f32 0.0, %v323
        %v325 = vmul.f32 %v324, 1.442695
        %v326 = vpow.pop %v325
        %v327 = vadd.f32 %v326, 1.0
        %v328 = vrcp.pop %v327
        %v329 = vmul.f32 1.0, %v328
        %v330 = vmul.f32 %v323, %v329
        %vm331 = vcmask 523264
        %332 = vst.msk [vmem:[%s232] sm:$0xff] %vm331, %v330
        %s333 = sand.u32 %s134, 1
        %s334 = scalar_lea.sflag [#allocation4], %s333
        %s335 = sand.u32 %s134, 1
        %s336 = smul.addr %s335, 8
        %s337 = scalar_lea.vmem [#allocation5], %s336
        // Predicated region
        $region41: #{tpu_custom_call.1} parent=35 // pred_check
          %p338 = pneg %p144
        $region42: #{tpu_custom_call.1} parent=35 // pred_check_branch
          %340 = sbr.rel (%p338) target = $region44
        $region43: #{tpu_custom_call.1} parent=35 // pred_region
          %s342 = ssub.s32 128, 128
          %343 = vsyncadd %s334, %s342
          %s344 = sadd.s32 %s26, %s25
          %s345 = smul.addr %s344, 128
          %s346 = scalar_lea.hbm %s4, %s345
          %s348 = sshll.u32 %s337, 4
          %s349 = int_to_ptr.vmem [resolvable:$true] %s348
          %351 = dma.vmem_to_hbm [thread:$0]  %s349, 128, %s346, %s334
        $region44: #{tpu_custom_call.1} parent=35 // pred_fallthru
          _
      $region36: #{tpu_custom_call.1} parent=5 // pred_fallthru
        _
      %p352 = scmp.le.s32.totalorder 2, %s16
      // Predicated region
      $region45: #{tpu_custom_call.1} parent=5 // pred_check
        %p353 = pneg %p352
      $region46: #{tpu_custom_call.1} parent=5 // pred_check_branch
        %355 = sbr.rel (%p353) target = $region48
      $region47: #{tpu_custom_call.1} parent=5 // pred_region
        %s356 = ssub.s32 %s16, 2
        // Predicated region
        $region49: #{tpu_custom_call.1} parent=47 // pred_check
          %p357 = pneg %p150
        $region50: #{tpu_custom_call.1} parent=47 // pred_check_branch
          %359 = sbr.rel (%p357) target = $region52
        $region51: #{tpu_custom_call.1} parent=47 // pred_region
          %s360 = sand.u32 %s135, 1
          %s361 = scalar_lea.sflag [#allocation4], %s360
          %s362 = sand.u32 %s135, 1
          %s363 = smul.addr %s362, 8
          %s364 = scalar_lea.vmem [#allocation5], %s363
          %365 = dma.done %s361, 128
        $region52: #{tpu_custom_call.1} parent=47 // pred_fallthru
          _
      $region48: #{tpu_custom_call.1} parent=5 // pred_fallthru
        _
    $region6: #{tpu_custom_call.1} parent=1 // loop_footer
      %s20 = sadd.s32 1, %s16
    $region7: #{tpu_custom_call.1} parent=1 // loop_footer_branch
      %15 = sbr.rel target = $region3
    $region8: #{tpu_custom_call.1} parent=1 // loop_exit
      _
    %366 = vsyncpa [#allocation3], 1
    %s367 = scalar_lea.sflag [#allocation3], 1
    %368 = vsyncpa %s367, 1
    %369 = vsyncpa [#allocation4], 1
    %s370 = scalar_lea.sflag [#allocation4], 1
    %371 = vsyncpa %s370, 1

</llo_original>
